<compile_context>
chip_gen: v6e
topology: v6e:2x2x1
jax: 0.10.0
libtpu: 0.0.40
codegen_flags: <defaults>
</compile_context>

<pallas_src>
import jax
import jax.numpy as jnp
from jax.experimental import pallas as pl
from jax.experimental.pallas import tpu as pltpu


def _trap_kernel(x_ref, center_ref, slope_up_ref, top_ref, slope_down_ref, o_ref):
    # Upcast once; lets callers store params/activations in bf16 at the boundary.
    x = x_ref[...].astype(jnp.float32)
    center = center_ref[...].astype(jnp.float32)
    su = slope_up_ref[...].astype(jnp.float32)
    sd = slope_down_ref[...].astype(jnp.float32)
    t = top_ref[...].astype(jnp.float32)

    slope_up = jnp.exp(su)                 # EUP
    slope_down = -jnp.exp(sd)              # EUP
    top_plat = jnp.maximum(t, 0.01 * t)    # LeakyReLU(0.01), single VALU max
    half = top_plat * 0.5
    xc = x - center

    # core(z) = (tanh(2z-1)+1)/2 with z = 1 + slope*(xc ± half)
    #   => 2z-1 = 2*slope*(xc ± half) + 1   (single native tanh per branch)
    m = 0.5 * (jnp.tanh(2.0 * slope_up * (xc + half) + 1.0) + 1.0)    # EUP
    n = 0.5 * (jnp.tanh(2.0 * slope_down * (xc - half) + 1.0) + 1.0)  # EUP

    o_ref[...] = (m * n).astype(o_ref.dtype)


def strictly_trap_function(x, center, slope_up, top_plat_len, slope_down):
    """Elementwise trapezoid membership function. All args share one shape."""
    orig_shape = x.shape
    orig_dtype = x.dtype
    total = x.size
    lanes = 128
    rows = pl.cdiv(total, lanes)
    padded_total = rows * lanes            # only <=127 elements of pad, at most

    # Tile sizing: 2048 rows => 1 MiB/buffer f32; 6 arrays x 2 buffers = 12 MiB,
    # under v5e's 16 MiB scoped-VMEM default and comfortably under v6e/v7x's
    # 32 MiB default. For small inputs shrink to a single (8-aligned) block.
    max_tile_rows = 2048
    tile_rows = min(max_tile_rows, ((rows + 7) // 8) * 8)
    grid = (pl.cdiv(rows, tile_rows),)     # last block may be partial — OK

    def flat(a):
        a = a.reshape(-1)
        if padded_total != total:          # only when total % 128 != 0
            a = jnp.pad(a, (0, padded_total - total))
        return a.reshape(rows, lanes)

    block = pl.BlockSpec((tile_rows, lanes), lambda i: (i, 0))

    itemsize = jnp.dtype(orig_dtype).itemsize
    cost = pl.CostEstimate(
        flops=12 * padded_total,                      # ~12 VPU flops / element
        transcendentals=4 * padded_total,             # 2 exp + 2 tanh / element
        bytes_accessed=6 * itemsize * padded_total,   # 5 inputs + 1 output
    )

    out2d = pl.pallas_call(
        _trap_kernel,
        out_shape=jax.ShapeDtypeStruct((rows, lanes), orig_dtype),
        grid_spec=pltpu.PrefetchScalarGridSpec(
            num_scalar_prefetch=0,
            grid=grid,
            in_specs=[block, block, block, block, block],
            out_specs=block,
        ),
        compiler_params=pltpu.CompilerParams(
            dimension_semantics=("parallel",),
        ),
        cost_estimate=cost,
    )(flat(x), flat(center), flat(slope_up), flat(top_plat_len), flat(slope_down))

    if padded_total != total:
        return out2d.reshape(-1)[:total].reshape(orig_shape)
    return out2d.reshape(orig_shape)


def _reference(x, center, slope_up_p, top_p, slope_down_p):
    # Literal transcription of the PyTorch forward (tanh form) for verification.
    slope_up = jnp.exp(slope_up_p)
    slope_down = -jnp.exp(slope_down_p)
    top = jnp.where(top_p >= 0, top_p, 0.01 * top_p)
    core = lambda z: (jnp.tanh(2.0 * z - 1.0) + 1.0) * 0.5
    m = core(1.0 + slope_up * (x - center + top / 2))
    n = core(1.0 + slope_down * (x - center - top / 2))
    return m * n


if __name__ == "__main__":
    # input_shape implied by NCHW conv-style tensors: (batch=2, C=4, H=16, W=16)
    shape = (2, 4, 16, 16)
    key = jax.random.PRNGKey(0)
    kx, kc, ku, kt, kd = jax.random.split(key, 5)

    x = jax.random.normal(kx, shape, dtype=jnp.float32)
    # Parameters: module uses torch.rand(input_shape) when value is None.
    center = jax.random.uniform(kc, shape, dtype=jnp.float32)
    slope_up = jax.random.uniform(ku, shape, dtype=jnp.float32)
    top_plat_len = jax.random.uniform(kt, shape, dtype=jnp.float32) - 0.5  # exercise LeakyReLU branch
    slope_down = jax.random.uniform(kd, shape, dtype=jnp.float32)

    out = strictly_trap_function(x, center, slope_up, top_plat_len, slope_down)
    out = jax.block_until_ready(out)

    ref = _reference(x, center, slope_up, top_plat_len, slope_down)
    assert out.shape == shape
    assert jnp.allclose(out, ref, atol=1e-5, rtol=1e-5), "mismatch vs reference"
    print("KERNEL_OK")
</pallas_src>

<mosaic_0001>
module attributes {stable_mosaic.version = 11 : i64} {
  func.func @_trap_kernel(%arg0: i32, %arg1: memref<16x128xf32, #tpu.memory_space<vmem>>, %arg2: memref<16x128xf32, #tpu.memory_space<vmem>>, %arg3: memref<16x128xf32, #tpu.memory_space<vmem>>, %arg4: memref<16x128xf32, #tpu.memory_space<vmem>>, %arg5: memref<16x128xf32, #tpu.memory_space<vmem>>, %arg6: memref<16x128xf32, #tpu.memory_space<vmem>>) attributes {dimension_semantics = [#tpu.dimension_semantics<parallel>], iteration_bounds = array<i64: 1>, scalar_prefetch = 0 : i64, scratch_operands = 0 : i64, tpu.core_type = #tpu.core_type<tc>, window_params = [{transform_indices = @transform_0, window_bounds = array<i64: 16, 128>}, {transform_indices = @transform_1, window_bounds = array<i64: 16, 128>}, {transform_indices = @transform_2, window_bounds = array<i64: 16, 128>}, {transform_indices = @transform_3, window_bounds = array<i64: 16, 128>}, {transform_indices = @transform_4, window_bounds = array<i64: 16, 128>}, {transform_indices = @transform_5, window_bounds = array<i64: 16, 128>}]} {
    %c0 = arith.constant 0 : index
    %c0_0 = arith.constant 0 : index
    %0 = vector.load %arg1[%c0, %c0_0] : memref<16x128xf32, #tpu.memory_space<vmem>>, vector<16x128xf32>
    %c0_1 = arith.constant 0 : index
    %c0_2 = arith.constant 0 : index
    %1 = vector.load %arg2[%c0_1, %c0_2] : memref<16x128xf32, #tpu.memory_space<vmem>>, vector<16x128xf32>
    %c0_3 = arith.constant 0 : index
    %c0_4 = arith.constant 0 : index
    %2 = vector.load %arg3[%c0_3, %c0_4] : memref<16x128xf32, #tpu.memory_space<vmem>>, vector<16x128xf32>
    %c0_5 = arith.constant 0 : index
    %c0_6 = arith.constant 0 : index
    %3 = vector.load %arg5[%c0_5, %c0_6] : memref<16x128xf32, #tpu.memory_space<vmem>>, vector<16x128xf32>
    %c0_7 = arith.constant 0 : index
    %c0_8 = arith.constant 0 : index
    %4 = vector.load %arg4[%c0_7, %c0_8] : memref<16x128xf32, #tpu.memory_space<vmem>>, vector<16x128xf32>
    %5 = math.exp %2 : vector<16x128xf32>
    %6 = math.exp %3 : vector<16x128xf32>
    %cst = arith.constant 0.000000e+00 : f32
    %7 = vector.broadcast %cst : f32 to vector<16x128xf32>
    %8 = arith.subf %7, %6 : vector<16x128xf32>
    %cst_9 = arith.constant 0.00999999977 : f32
    %9 = vector.broadcast %cst_9 : f32 to vector<16x128xf32>
    %10 = arith.mulf %9, %4 : vector<16x128xf32>
    %11 = arith.maximumf %4, %10 : vector<16x128xf32>
    %cst_10 = arith.constant 5.000000e-01 : f32
    %12 = vector.broadcast %cst_10 : f32 to vector<16x128xf32>
    %13 = arith.mulf %11, %12 : vector<16x128xf32>
    %14 = arith.subf %0, %1 : vector<16x128xf32>
    %cst_11 = arith.constant 2.000000e+00 : f32
    %15 = vector.broadcast %cst_11 : f32 to vector<16x128xf32>
    %16 = arith.mulf %15, %5 : vector<16x128xf32>
    %17 = arith.addf %14, %13 : vector<16x128xf32>
    %18 = arith.mulf %16, %17 : vector<16x128xf32>
    %cst_12 = arith.constant 1.000000e+00 : f32
    %19 = vector.broadcast %cst_12 : f32 to vector<16x128xf32>
    %20 = arith.addf %18, %19 : vector<16x128xf32>
    %21 = math.tanh %20 : vector<16x128xf32>
    %cst_13 = arith.constant 1.000000e+00 : f32
    %22 = vector.broadcast %cst_13 : f32 to vector<16x128xf32>
    %23 = arith.addf %21, %22 : vector<16x128xf32>
    %cst_14 = arith.constant 5.000000e-01 : f32
    %24 = vector.broadcast %cst_14 : f32 to vector<16x128xf32>
    %25 = arith.mulf %24, %23 : vector<16x128xf32>
    %cst_15 = arith.constant 2.000000e+00 : f32
    %26 = vector.broadcast %cst_15 : f32 to vector<16x128xf32>
    %27 = arith.mulf %26, %8 : vector<16x128xf32>
    %28 = arith.subf %14, %13 : vector<16x128xf32>
    %29 = arith.mulf %27, %28 : vector<16x128xf32>
    %cst_16 = arith.constant 1.000000e+00 : f32
    %30 = vector.broadcast %cst_16 : f32 to vector<16x128xf32>
    %31 = arith.addf %29, %30 : vector<16x128xf32>
    %32 = math.tanh %31 : vector<16x128xf32>
    %cst_17 = arith.constant 1.000000e+00 : f32
    %33 = vector.broadcast %cst_17 : f32 to vector<16x128xf32>
    %34 = arith.addf %32, %33 : vector<16x128xf32>
    %cst_18 = arith.constant 5.000000e-01 : f32
    %35 = vector.broadcast %cst_18 : f32 to vector<16x128xf32>
    %36 = arith.mulf %35, %34 : vector<16x128xf32>
    %37 = arith.mulf %25, %36 : vector<16x128xf32>
    %c0_19 = arith.constant 0 : index
    %c0_20 = arith.constant 0 : index
    %38 = vector.load %arg6[%c0_19, %c0_20] : memref<16x128xf32, #tpu.memory_space<vmem>>, vector<16x128xf32>
    tpu.vector_store %arg6[%c0_19, %c0_20], %37 {strides = array<i32>} : memref<16x128xf32, #tpu.memory_space<vmem>>, vector<16x128xf32>,
    return
  }
  func.func @transform_0(%arg0: i32) -> (i32, i32) {
    %c0_i32 = arith.constant 0 : i32
    %c0_i32_0 = arith.constant 0 : i32
    return %arg0, %c0_i32 : i32, i32
  }
  func.func @transform_1(%arg0: i32) -> (i32, i32) {
    %c0_i32 = arith.constant 0 : i32
    %c0_i32_0 = arith.constant 0 : i32
    return %arg0, %c0_i32 : i32, i32
  }
  func.func @transform_2(%arg0: i32) -> (i32, i32) {
    %c0_i32 = arith.constant 0 : i32
    %c0_i32_0 = arith.constant 0 : i32
    return %arg0, %c0_i32 : i32, i32
  }
  func.func @transform_3(%arg0: i32) -> (i32, i32) {
    %c0_i32 = arith.constant 0 : i32
    %c0_i32_0 = arith.constant 0 : i32
    return %arg0, %c0_i32 : i32, i32
  }
  func.func @transform_4(%arg0: i32) -> (i32, i32) {
    %c0_i32 = arith.constant 0 : i32
    %c0_i32_0 = arith.constant 0 : i32
    return %arg0, %c0_i32 : i32, i32
  }
  func.func @transform_5(%arg0: i32) -> (i32, i32) {
    %c0_i32 = arith.constant 0 : i32
    %c0_i32_0 = arith.constant 0 : i32
    return %arg0, %c0_i32 : i32, i32
  }
}

</mosaic_0001>

<llo_original>
// kernel: tpu_custom_call.1
$region0: #{tpu_custom_call.1}
  #allocation0 [shape = 'u32[]', space=smem, size = 0x4, offset = 0x4, fixed_abs, tag = 'smem constant byte address 0x4 - core index']
  #allocation1 [shape = 'u32[144,128]{1,0:T(1,128)}', space=vmem, size = 0x12000, scoped, tag = 'internal scratch']
  %s0 = inlined_call_operand.hbm [shape: f32[16,128], index: 0, kind: input, shape index: {}]
  %s1 = inlined_call_operand.hbm [shape: f32[16,128], index: 1, kind: input, shape index: {}]
  %s2 = inlined_call_operand.hbm [shape: f32[16,128], index: 2, kind: input, shape index: {}]
  %s3 = inlined_call_operand.hbm [shape: f32[16,128], index: 3, kind: input, shape index: {}]
  %s4 = inlined_call_operand.hbm [shape: f32[16,128], index: 4, kind: input, shape index: {}]
  %s5 = inlined_call_operand.hbm [shape: f32[16,128], index: 5, kind: output, shape index: {}]
  %s6 = sld [smem:[#allocation0]]
  $region50: #{tpu_custom_call.1} parent=0
    _
  %s8 = ssub.s32 1, %s6
  %s9 = scalar_select 0, %s8, %s6
  $region1: #{tpu_custom_call.1} parent=0
    #allocation2 [shape = 'u8[8192]{0}', space=vmem, size = 0x2000, scoped, tag = 'input window, operand 0, single buffered']
    #allocation3 [shape = 's32[1]{0}', space=sflag, size = 0x4, scoped, tag = 'scoped memory for tpu_custom_call.1']
    #allocation4 [shape = 's32[1]{0}', space=sflag, size = 0x4, scoped, tag = 'scoped memory for tpu_custom_call.1']
    #allocation5 [shape = 'u8[8192]{0}', space=vmem, size = 0x2000, scoped, tag = 'input window, operand 1, single buffered']
    #allocation6 [shape = 's32[1]{0}', space=sflag, size = 0x4, scoped, tag = 'scoped memory for tpu_custom_call.1']
    #allocation7 [shape = 'u8[8192]{0}', space=vmem, size = 0x2000, scoped, tag = 'input window, operand 2, single buffered']
    #allocation8 [shape = 'u8[8192]{0}', space=vmem, size = 0x2000, scoped, tag = 'input window, operand 3, single buffered']
    #allocation9 [shape = 's32[1]{0}', space=sflag, size = 0x4, scoped, tag = 'scoped memory for tpu_custom_call.1']
    #allocation10 [shape = 'u8[8192]{0}', space=vmem, size = 0x2000, scoped, tag = 'input window, operand 4, single buffered']
    #allocation11 [shape = 'u8[8192]{0}', space=vmem, size = 0x2000, scoped, tag = 'output window, operand 0, single buffered']
    %10 = vsyncpa [#allocation3], 0
    %11 = vsyncpa [#allocation6], 0
    %12 = vsyncpa [#allocation9], 0
    %13 = vsyncpa [#allocation4], 0
    // Predicated region
    $region2: #{tpu_custom_call.1} parent=1 // pred_check
      _
    $region3: #{tpu_custom_call.1} parent=1 // pred_check_branch
      %15 = sbr.rel (0) target = $region5
    $region4: #{tpu_custom_call.1} parent=1 // pred_region
      %s17 = ssub.s32 256, 256
      %18 = vsyncadd [#allocation3], %s17
      %s19 = sshll.u32 [#allocation2], 4
      %s20 = int_to_ptr.vmem [resolvable:$true] %s19
      %25 = dma.hbm_to_vmem [thread:$0]  %s0, 256, %s20, [#allocation3], 128, 128, 8
    $region5: #{tpu_custom_call.1} parent=1 // pred_fallthru
      _
    // Predicated region
    $region6: #{tpu_custom_call.1} parent=1 // pred_check
      _
    $region7: #{tpu_custom_call.1} parent=1 // pred_check_branch
      %27 = sbr.rel (0) target = $region9
    $region8: #{tpu_custom_call.1} parent=1 // pred_region
      %s29 = ssub.s32 256, 256
      %30 = vsyncadd [#allocation6], %s29
      %s31 = sshll.u32 [#allocation5], 4
      %s32 = int_to_ptr.vmem [resolvable:$true] %s31
      %37 = dma.hbm_to_vmem [thread:$0]  %s1, 256, %s32, [#allocation6], 128, 128, 8
    $region9: #{tpu_custom_call.1} parent=1 // pred_fallthru
      _
    // Predicated region
    $region10: #{tpu_custom_call.1} parent=1 // pred_check
      _
    $region11: #{tpu_custom_call.1} parent=1 // pred_check_branch
      %39 = sbr.rel (0) target = $region13
    $region12: #{tpu_custom_call.1} parent=1 // pred_region
      %s41 = ssub.s32 256, 256
      %42 = vsyncadd [#allocation6], %s41
      %s43 = sshll.u32 [#allocation7], 4
      %s44 = int_to_ptr.vmem [resolvable:$true] %s43
      %49 = dma.hbm_to_vmem [thread:$0]  %s2, 256, %s44, [#allocation6], 128, 128, 8
    $region13: #{tpu_custom_call.1} parent=1 // pred_fallthru
      _
    // Predicated region
    $region14: #{tpu_custom_call.1} parent=1 // pred_check
      _
    $region15: #{tpu_custom_call.1} parent=1 // pred_check_branch
      %51 = sbr.rel (0) target = $region17
    $region16: #{tpu_custom_call.1} parent=1 // pred_region
      %s53 = ssub.s32 256, 256
      %54 = vsyncadd [#allocation9], %s53
      %s55 = sshll.u32 [#allocation8], 4
      %s56 = int_to_ptr.vmem [resolvable:$true] %s55
      %61 = dma.hbm_to_vmem [thread:$0]  %s3, 256, %s56, [#allocation9], 128, 128, 8
    $region17: #{tpu_custom_call.1} parent=1 // pred_fallthru
      _
    // Predicated region
    $region18: #{tpu_custom_call.1} parent=1 // pred_check
      _
    $region19: #{tpu_custom_call.1} parent=1 // pred_check_branch
      %63 = sbr.rel (0) target = $region21
    $region20: #{tpu_custom_call.1} parent=1 // pred_region
      %s65 = ssub.s32 256, 256
      %66 = vsyncadd [#allocation9], %s65
      %s67 = sshll.u32 [#allocation10], 4
      %s68 = int_to_ptr.vmem [resolvable:$true] %s67
      %73 = dma.hbm_to_vmem [thread:$0]  %s4, 256, %s68, [#allocation9], 128, 128, 8
    $region21: #{tpu_custom_call.1} parent=1 // pred_fallthru
      _
    // Predicated region
    $region22: #{tpu_custom_call.1} parent=1 // pred_check
      _
    $region23: #{tpu_custom_call.1} parent=1 // pred_check_branch
      %75 = sbr.rel (0) target = $region25
    $region24: #{tpu_custom_call.1} parent=1 // pred_region
      %76 = dma.done [#allocation3], 256
    $region25: #{tpu_custom_call.1} parent=1 // pred_fallthru
      _
    // Predicated region
    $region26: #{tpu_custom_call.1} parent=1 // pred_check
      _
    $region27: #{tpu_custom_call.1} parent=1 // pred_check_branch
      %78 = sbr.rel (0) target = $region29
    $region28: #{tpu_custom_call.1} parent=1 // pred_region
      %79 = dma.done [#allocation6], 256
    $region29: #{tpu_custom_call.1} parent=1 // pred_fallthru
      _
    // Predicated region
    $region30: #{tpu_custom_call.1} parent=1 // pred_check
      _
    $region31: #{tpu_custom_call.1} parent=1 // pred_check_branch
      %81 = sbr.rel (0) target = $region33
    $region32: #{tpu_custom_call.1} parent=1 // pred_region
      %82 = dma.done [#allocation6], 256
    $region33: #{tpu_custom_call.1} parent=1 // pred_fallthru
      _
    // Predicated region
    $region34: #{tpu_custom_call.1} parent=1 // pred_check
      _
    $region35: #{tpu_custom_call.1} parent=1 // pred_check_branch
      %84 = sbr.rel (0) target = $region37
    $region36: #{tpu_custom_call.1} parent=1 // pred_region
      %85 = dma.done [#allocation9], 256
    $region37: #{tpu_custom_call.1} parent=1 // pred_fallthru
      _
    // Predicated region
    $region38: #{tpu_custom_call.1} parent=1 // pred_check
      _
    $region39: #{tpu_custom_call.1} parent=1 // pred_check_branch
      %87 = sbr.rel (0) target = $region41
    $region40: #{tpu_custom_call.1} parent=1 // pred_region
      %88 = dma.done [#allocation9], 256
    $region41: #{tpu_custom_call.1} parent=1 // pred_fallthru
      _
    %v89 = vld [vmem:[#allocation2] sm:$0xff]
    %v90 = vld [vmem:[#allocation2 + $0x8] sm:$0xff]
    %v91 = vld [vmem:[#allocation5] sm:$0xff]
    %v92 = vld [vmem:[#allocation5 + $0x8] sm:$0xff]
    %v93 = vld [vmem:[#allocation7] sm:$0xff]
    %v94 = vld [vmem:[#allocation7 + $0x8] sm:$0xff]
    %v95 = vld [vmem:[#allocation10] sm:$0xff]
    %v96 = vld [vmem:[#allocation10 + $0x8] sm:$0xff]
    %v97 = vld [vmem:[#allocation8] sm:$0xff]
    %v98 = vld [vmem:[#allocation8 + $0x8] sm:$0xff]
    %v99 = vmul.f32 %v93, 1.442695
    %v100 = vpow.pop %v99
    %v101 = vmul.f32 %v94, 1.442695
    %v102 = vpow.pop %v101
    %v103 = vmul.f32 %v95, 1.442695
    %v104 = vpow.pop %v103
    %v105 = vmul.f32 %v96, 1.442695
    %v106 = vpow.pop %v105
    %v107 = vsub.f32 0.0, %v104
    %v108 = vsub.f32 0.0, %v106
    %v109 = vmul.f32 %v97, 0.01
    %v110 = vmul.f32 %v98, 0.01
    %v111 = vmax.f32 %v97, %v109
    %v112 = vmax.f32 %v98, %v110
    %v113 = vmul.f32 %v111, 0.5
    %v114 = vmul.f32 %v112, 0.5
    %v115 = vsub.f32 %v89, %v91
    %v116 = vsub.f32 %v90, %v92
    %v117 = vmul.f32 %v100, 2.0
    %v118 = vmul.f32 %v102, 2.0
    %v119 = vadd.f32 %v115, %v113
    %v120 = vadd.f32 %v116, %v114
    %v121 = vmul.f32 %v117, %v119
    %v122 = vmul.f32 %v118, %v120
    %v123 = vadd.f32 %v121, 1.0
    %v124 = vadd.f32 %v122, 1.0
    %v125 = vtanh.pop %v123
    %v126 = vtanh.pop %v124
    %v127 = vadd.f32 %v125, 1.0
    %v128 = vadd.f32 %v126, 1.0
    %v129 = vmul.f32 %v127, 0.5
    %v130 = vmul.f32 %v128, 0.5
    %v131 = vmul.f32 %v107, 2.0
    %v132 = vmul.f32 %v108, 2.0
    %v133 = vsub.f32 %v115, %v113
    %v134 = vsub.f32 %v116, %v114
    %v135 = vmul.f32 %v131, %v133
    %v136 = vmul.f32 %v132, %v134
    %v137 = vadd.f32 %v135, 1.0
    %v138 = vadd.f32 %v136, 1.0
    %v139 = vtanh.pop %v137
    %v140 = vtanh.pop %v138
    %v141 = vadd.f32 %v139, 1.0
    %v142 = vadd.f32 %v140, 1.0
    %v143 = vmul.f32 %v141, 0.5
    %v144 = vmul.f32 %v142, 0.5
    %v145 = vmul.f32 %v129, %v143
    %v146 = vmul.f32 %v130, %v144
    %147 = vst [vmem:[#allocation11] sm:$0xff] %v145
    %148 = vst [vmem:[#allocation11 + $0x8] sm:$0xff] %v146
    // Predicated region
    $region42: #{tpu_custom_call.1} parent=1 // pred_check
      _
    $region43: #{tpu_custom_call.1} parent=1 // pred_check_branch
      %150 = sbr.rel (0) target = $region45
    $region44: #{tpu_custom_call.1} parent=1 // pred_region
      %s152 = ssub.s32 256, 256
      %153 = vsyncadd [#allocation4], %s152
      %s154 = sshll.u32 [#allocation11], 4
      %s155 = int_to_ptr.vmem [resolvable:$true] %s154
      %160 = dma.vmem_to_hbm [thread:$0]  %s155, 256, %s5, [#allocation4], 128, 128, 8
    $region45: #{tpu_custom_call.1} parent=1 // pred_fallthru
      _
    // Predicated region
    $region46: #{tpu_custom_call.1} parent=1 // pred_check
      _
    $region47: #{tpu_custom_call.1} parent=1 // pred_check_branch
      %162 = sbr.rel (0) target = $region49
    $region48: #{tpu_custom_call.1} parent=1 // pred_region
      %163 = dma.done [#allocation4], 256
    $region49: #{tpu_custom_call.1} parent=1 // pred_fallthru
      _
    %164 = vsyncpa [#allocation3], 1
    %165 = vsyncpa [#allocation6], 1
    %166 = vsyncpa [#allocation9], 1
    %167 = vsyncpa [#allocation4], 1

</llo_original>
